<compile_context>
chip_gen: v6e
topology: v6e:2x2x1
jax: 0.10.0
libtpu: 0.0.40
codegen_flags: <defaults>
</compile_context>

<pallas_src>
import jax
import jax.numpy as jnp
from jax.experimental import pallas as pl
from jax.experimental.pallas import tpu as pltpu

# ---- model dimensions (small, consistent with the module) ----
B, S, D = 2, 8, 32      # batch, seq, d_model
DFF = 64                # d_ff


def ffn_kernel(x_ref, w1_ref, b1_ref, w2_ref, b2_ref, out_ref):
    # x_ref: (B*S, D). Single grid point -> whole batch processed in one block.
    x = x_ref[...]
    hid = jnp.dot(x, w1_ref[...], preferred_element_type=jnp.float32) + b1_ref[...]
    hid = jnp.maximum(hid, 0.0)                  # ReLU; dropout = identity (eval mode)
    out = jnp.dot(hid, w2_ref[...], preferred_element_type=jnp.float32) + b2_ref[...]
    out_ref[...] = out.astype(out_ref.dtype)


def positionwise_feed_forward(x, w1, b1, w2, b2):
    """x: (B, S, D) f32.  Returns (B, S, D) f32.  Dropout is identity (eval)."""
    BS = B * S
    x2d = x.reshape(BS, D)                       # token-major 2-D block for the MXU
    vmem = pltpu.MemorySpace.VMEM
    out2d = pl.pallas_call(
        ffn_kernel,
        out_shape=jax.ShapeDtypeStruct((BS, D), jnp.float32),
        in_specs=[
            pl.BlockSpec(memory_space=vmem),     # x       (B*S, D)
            pl.BlockSpec(memory_space=vmem),     # w1      (D, DFF)
            pl.BlockSpec(memory_space=vmem),     # b1      (1, DFF)
            pl.BlockSpec(memory_space=vmem),     # w2      (DFF, D)
            pl.BlockSpec(memory_space=vmem),     # b2      (1, D)
        ],
        out_specs=pl.BlockSpec(memory_space=vmem),
    )(x2d, w1, b1, w2, b2)
    return out2d.reshape(B, S, D)


# ---------------- pure-JAX reference (for correctness check) ----------------
def reference(x, w1, b1, w2, b2):
    return jnp.maximum(x @ w1 + b1, 0.0) @ w2 + b2


if __name__ == "__main__":
    key = jax.random.PRNGKey(0)
    k1, k2, k3, k4, kx = jax.random.split(key, 5)

    w1 = (0.05 * jax.random.normal(k1, (D, DFF))).astype(jnp.float32)
    b1 = (0.01 * jax.random.normal(k2, (1, DFF))).astype(jnp.float32)
    w2 = (0.05 * jax.random.normal(k3, (DFF, D))).astype(jnp.float32)
    b2 = (0.01 * jax.random.normal(k4, (1, D))).astype(jnp.float32)
    x = jax.random.normal(kx, (B, S, D), dtype=jnp.float32)

    out = positionwise_feed_forward(x, w1, b1, w2, b2)
    out = jax.block_until_ready(out)

    ref = reference(x, w1, b1, w2, b2)
    assert out.shape == (B, S, D)
    assert jnp.allclose(out, ref, rtol=1e-4, atol=1e-4), "mismatch vs reference"

    # TODO(synk): dropout is modeled as identity (eval mode); training-mode dropout
    # would need pltpu.prng_seed + pltpu.prng_random_bits for an in-kernel mask.
    print("KERNEL_OK")
</pallas_src>

<mosaic_0001>
module attributes {stable_mosaic.version = 11 : i64} {
  func.func @ffn_kernel(%arg0: memref<16x32xf32, #tpu.memory_space<vmem>>, %arg1: memref<32x64xf32, #tpu.memory_space<vmem>>, %arg2: memref<1x64xf32, #tpu.memory_space<vmem>>, %arg3: memref<64x32xf32, #tpu.memory_space<vmem>>, %arg4: memref<1x32xf32, #tpu.memory_space<vmem>>, %arg5: memref<16x32xf32, #tpu.memory_space<vmem>>) attributes {dimension_semantics = [], scalar_prefetch = 0 : i64, scratch_operands = 0 : i64, tpu.core_type = #tpu.core_type<tc>} {
    %c0 = arith.constant 0 : index
    %c0_0 = arith.constant 0 : index
    %0 = vector.load %arg0[%c0, %c0_0] : memref<16x32xf32, #tpu.memory_space<vmem>>, vector<16x32xf32>
    %c0_1 = arith.constant 0 : index
    %c0_2 = arith.constant 0 : index
    %1 = vector.load %arg1[%c0_1, %c0_2] : memref<32x64xf32, #tpu.memory_space<vmem>>, vector<32x64xf32>
    %cst = arith.constant dense<0.000000e+00> : vector<16x64xf32>
    %2 = tpu.matmul %0, %1, %cst {dimension_numbers = #tpu.dot_dimension_numbers<[1], [0], [0], [1], [0, 0, 1, 1], [], []>} : vector<16x32xf32>, vector<32x64xf32>, vector<16x64xf32> -> vector<16x64xf32>
    %c0_3 = arith.constant 0 : index
    %c0_4 = arith.constant 0 : index
    %3 = vector.load %arg2[%c0_3, %c0_4] : memref<1x64xf32, #tpu.memory_space<vmem>>, vector<1x64xf32>
    %4 = vector.broadcast %3 : vector<1x64xf32> to vector<16x64xf32>
    %5 = arith.addf %2, %4 : vector<16x64xf32>
    %cst_5 = arith.constant 0.000000e+00 : f32
    %6 = vector.broadcast %cst_5 : f32 to vector<16x64xf32>
    %7 = arith.maximumf %5, %6 : vector<16x64xf32>
    %c0_6 = arith.constant 0 : index
    %c0_7 = arith.constant 0 : index
    %8 = vector.load %arg3[%c0_6, %c0_7] : memref<64x32xf32, #tpu.memory_space<vmem>>, vector<64x32xf32>
    %cst_8 = arith.constant dense<0.000000e+00> : vector<16x32xf32>
    %9 = tpu.matmul %7, %8, %cst_8 {dimension_numbers = #tpu.dot_dimension_numbers<[1], [0], [0], [1], [0, 0, 1, 1], [], []>} : vector<16x64xf32>, vector<64x32xf32>, vector<16x32xf32> -> vector<16x32xf32>
    %c0_9 = arith.constant 0 : index
    %c0_10 = arith.constant 0 : index
    %10 = vector.load %arg4[%c0_9, %c0_10] : memref<1x32xf32, #tpu.memory_space<vmem>>, vector<1x32xf32>
    %11 = vector.broadcast %10 : vector<1x32xf32> to vector<16x32xf32>
    %12 = arith.addf %9, %11 : vector<16x32xf32>
    %c0_11 = arith.constant 0 : index
    %c0_12 = arith.constant 0 : index
    %13 = vector.load %arg5[%c0_11, %c0_12] : memref<16x32xf32, #tpu.memory_space<vmem>>, vector<16x32xf32>
    tpu.vector_store %arg5[%c0_11, %c0_12], %12 {strides = array<i32>} : memref<16x32xf32, #tpu.memory_space<vmem>>, vector<16x32xf32>,
    return
  }
}

</mosaic_0001>

<llo_original>
// kernel: tpu_custom_call.1
$region0: #{tpu_custom_call.1}
  #allocation0 [shape = 'u32[]', space=smem, size = 0x4, offset = 0x4, fixed_abs, tag = 'smem constant byte address 0x4 - core index']
  #allocation1 [shape = 'u32[144,128]{1,0:T(1,128)}', space=vmem, size = 0x12000, scoped, tag = 'internal scratch']
  %s0 = inlined_call_operand.vmem [shape: f32[16,32], index: 0, kind: input, shape index: {}]
  %s1 = inlined_call_operand.vmem [shape: f32[32,64], index: 1, kind: input, shape index: {}]
  %s2 = inlined_call_operand.vmem [shape: f32[1,64], index: 2, kind: input, shape index: {}]
  %s3 = inlined_call_operand.vmem [shape: f32[64,32], index: 3, kind: input, shape index: {}]
  %s4 = inlined_call_operand.vmem [shape: f32[1,32], index: 4, kind: input, shape index: {}]
  %s5 = inlined_call_operand.hbm [shape: f32[16,32], index: 5, kind: output, shape index: {}]
  %s6 = sld [smem:[#allocation0]]
  $region30: #{tpu_custom_call.1} parent=0
    _
  %s8 = ssub.s32 1, %s6
  %s9 = scalar_select 0, %s8, %s6
  $region1: #{tpu_custom_call.1} parent=0
    #allocation2 [shape = 'u8[8192]{0}', space=vmem, size = 0x2000, scoped, tag = 'output window, operand 0, single buffered']
    #allocation3 [shape = 's32[1]{0}', space=sflag, size = 0x4, scoped, tag = 'scoped memory for tpu_custom_call.1']
    %10 = vsyncpa [#allocation3], 0
    // Predicated region
    $region2: #{tpu_custom_call.1} parent=1 // pred_check
      _
    $region3: #{tpu_custom_call.1} parent=1 // pred_check_branch
      %12 = sbr.rel (0) target = $region5
    $region4: #{tpu_custom_call.1} parent=1 // pred_region
      _
    $region5: #{tpu_custom_call.1} parent=1 // pred_fallthru
      _
    // Predicated region
    $region6: #{tpu_custom_call.1} parent=1 // pred_check
      _
    $region7: #{tpu_custom_call.1} parent=1 // pred_check_branch
      %14 = sbr.rel (0) target = $region9
    $region8: #{tpu_custom_call.1} parent=1 // pred_region
      _
    $region9: #{tpu_custom_call.1} parent=1 // pred_fallthru
      _
    // Predicated region
    $region10: #{tpu_custom_call.1} parent=1 // pred_check
      _
    $region11: #{tpu_custom_call.1} parent=1 // pred_check_branch
      %16 = sbr.rel (0) target = $region13
    $region12: #{tpu_custom_call.1} parent=1 // pred_region
      _
    $region13: #{tpu_custom_call.1} parent=1 // pred_fallthru
      _
    // Predicated region
    $region14: #{tpu_custom_call.1} parent=1 // pred_check
      _
    $region15: #{tpu_custom_call.1} parent=1 // pred_check_branch
      %18 = sbr.rel (0) target = $region17
    $region16: #{tpu_custom_call.1} parent=1 // pred_region
      _
    $region17: #{tpu_custom_call.1} parent=1 // pred_fallthru
      _
    // Predicated region
    $region18: #{tpu_custom_call.1} parent=1 // pred_check
      _
    $region19: #{tpu_custom_call.1} parent=1 // pred_check_branch
      %20 = sbr.rel (0) target = $region21
    $region20: #{tpu_custom_call.1} parent=1 // pred_region
      _
    $region21: #{tpu_custom_call.1} parent=1 // pred_fallthru
      _
    %v21 = vld [vmem:[%s0] sm:$0xff]
    %v22 = vld [vmem:[%s0 + $0x8] sm:$0xff]
    %v23 = vld [vmem:[%s1] sm:$0xff]
    %v24 = vld [vmem:[%s1 + $0x8] sm:$0xff]
    %v25 = vld [vmem:[%s1 + $0x10] sm:$0xff]
    %v26 = vld [vmem:[%s1 + $0x18] sm:$0xff]
    %v27 = vld [vmem:[%s2] sm:$0x1]
    %v29 = vlaneseq
    %v30 = vshrl.u32 %v29, 7
    %v31 = vsub.s32 0, %v30
    %v32 = vrot.slane %v27, %v31
    %vm34 = vcmask 261120
    %v36 = vsel %vm34, %v21, 0
    %v39 = vsel %vm34, %v22, 0
    %41 = vmatprep.subr.mxu0 0.0
    %42 = vmatpush1.msra.mxu0 0.0
    %43 = vmatprep.subr.mxu0 0.0
    %44 = vmatpush1.msra.mxu0 0.0
    %45 = vmatprep.subr.mxu0 0.0
    %46 = vmatpush1.msra.mxu0 0.0
    %47 = vmatprep.subr.mxu0 0.0
    %48 = vmatpush1.msra.mxu0 0.0
    %49 = vmatprep.subr.mxu0 0.0
    %50 = vmatpush1.msra.mxu0 0.0
    %51 = vmatprep.subr.mxu0 0.0
    %52 = vmatpush1.msra.mxu0 0.0
    %53 = vmatprep.subr.mxu0 0.0
    %54 = vmatpush1.msra.mxu0 0.0
    %55 = vmatprep.subr.mxu0 0.0
    %56 = vmatpush1.msra.mxu0 0.0
    %57 = vmatprep.subr.mxu0 0.0
    %58 = vmatpush1.msra.mxu0 0.0
    %59 = vmatprep.subr.mxu0 0.0
    %60 = vmatpush1.msra.mxu0 0.0
    %61 = vmatprep.subr.mxu0 0.0
    %62 = vmatpush1.msra.mxu0 0.0
    %63 = vmatprep.subr.mxu0 0.0
    %64 = vmatpush1.msra.mxu0 0.0
    %65 = vmatprep.subr.mxu0 0.0
    %66 = vmatpush1.msra.mxu0 %v26
    %67 = vmatprep.subr.mxu0 0.0
    %68 = vmatpush1.msra.mxu0 %v25
    %69 = vmatprep.subr.mxu0 0.0
    %70 = vmatpush1.msra.mxu0 %v24
    %71 = vmatprep.subr.mxu0 0.0
    %72 = vmatpush1.msra.mxu0 %v23
    %73 = vmatprep.subr.mxu0 0.0
    %74 = vmatpush2.msra.mxu0 0.0
    %75 = vmatprep.subr.mxu0 0.0
    %76 = vmatpush2.msra.mxu0 0.0
    %77 = vmatprep.subr.mxu0 0.0
    %78 = vmatpush2.msra.mxu0 0.0
    %79 = vmatprep.subr.mxu0 0.0
    %80 = vmatpush2.msra.mxu0 0.0
    %81 = vmatprep.subr.mxu0 0.0
    %82 = vmatpush2.msra.mxu0 0.0
    %83 = vmatprep.subr.mxu0 0.0
    %84 = vmatpush2.msra.mxu0 0.0
    %85 = vmatprep.subr.mxu0 0.0
    %86 = vmatpush2.msra.mxu0 0.0
    %87 = vmatprep.subr.mxu0 0.0
    %88 = vmatpush2.msra.mxu0 0.0
    %89 = vmatprep.subr.mxu0 0.0
    %90 = vmatpush2.msra.mxu0 0.0
    %91 = vmatprep.subr.mxu0 0.0
    %92 = vmatpush2.msra.mxu0 0.0
    %93 = vmatprep.subr.mxu0 0.0
    %94 = vmatpush2.msra.mxu0 0.0
    %95 = vmatprep.subr.mxu0 0.0
    %96 = vmatpush2.msra.mxu0 0.0
    %97 = vmatprep.subr.mxu0 0.0
    %98 = vmatpush2.msra.mxu0 0.0
    %99 = vmatprep.subr.mxu0 0.0
    %100 = vmatpush2.msra.mxu0 0.0
    %101 = vmatprep.subr.mxu0 0.0
    %102 = vmatpush2.msra.mxu0 0.0
    %103 = vmatprep.subr.mxu0 0.0
    %104 = vmatpush2.msra.mxu0 0.0
    %105 = vmatprep.mubr.f32.mxu0 0.0
    %106 = vmatmul.mubr.f32.gmra.mxu0 %v36
    %v107 = vpop.f32.mrf.mxu0
    %v108 = vadd.f32 %v32, %v107
    %v109 = vpop.f32.mrf.mxu0
    %110 = vmatprep.mubr.f32.mxu0 0.0
    %111 = vmatmul.mubr.f32.gmra.mxu0 %v39
    %v112 = vpop.f32.mrf.mxu0
    %v113 = vadd.f32 %v32, %v112
    %v114 = vpop.f32.mrf.mxu0
    %115 = vdwg.mxu0
    %v116 = vmax.f32 %v108, 0.0
    %v117 = vmax.f32 %v113, 0.0
    %v118 = vld [vmem:[%s3] sm:$0xff]
    %v119 = vld [vmem:[%s3 + $0x8] sm:$0xff]
    %v120 = vld [vmem:[%s3 + $0x10] sm:$0xff]
    %v121 = vld [vmem:[%s3 + $0x18] sm:$0xff]
    %v122 = vld [vmem:[%s3 + $0x20] sm:$0xff]
    %v123 = vld [vmem:[%s3 + $0x28] sm:$0xff]
    %v124 = vld [vmem:[%s3 + $0x30] sm:$0xff]
    %v125 = vld [vmem:[%s3 + $0x38] sm:$0xff]
    %v126 = vld [vmem:[%s4] sm:$0x1]
    %v128 = vlaneseq
    %v129 = vshrl.u32 %v128, 7
    %v130 = vsub.s32 0, %v129
    %v131 = vrot.slane %v126, %v130
    %vm133 = vcmask 523264
    %v135 = vsel %vm133, %v116, 0
    %v138 = vsel %vm133, %v117, 0
    %140 = vmatprep.subr.mxu0 0.0
    %141 = vmatpush1.msra.mxu0 0.0
    %142 = vmatprep.subr.mxu0 0.0
    %143 = vmatpush1.msra.mxu0 0.0
    %144 = vmatprep.subr.mxu0 0.0
    %145 = vmatpush1.msra.mxu0 0.0
    %146 = vmatprep.subr.mxu0 0.0
    %147 = vmatpush1.msra.mxu0 0.0
    %148 = vmatprep.subr.mxu0 0.0
    %149 = vmatpush1.msra.mxu0 0.0
    %150 = vmatprep.subr.mxu0 0.0
    %151 = vmatpush1.msra.mxu0 0.0
    %152 = vmatprep.subr.mxu0 0.0
    %153 = vmatpush1.msra.mxu0 0.0
    %154 = vmatprep.subr.mxu0 0.0
    %155 = vmatpush1.msra.mxu0 0.0
    %156 = vmatprep.subr.mxu0 0.0
    %157 = vmatpush1.msra.mxu0 %v125
    %158 = vmatprep.subr.mxu0 0.0
    %159 = vmatpush1.msra.mxu0 %v124
    %160 = vmatprep.subr.mxu0 0.0
    %161 = vmatpush1.msra.mxu0 %v123
    %162 = vmatprep.subr.mxu0 0.0
    %163 = vmatpush1.msra.mxu0 %v122
    %164 = vmatprep.subr.mxu0 0.0
    %165 = vmatpush1.msra.mxu0 %v121
    %166 = vmatprep.subr.mxu0 0.0
    %167 = vmatpush1.msra.mxu0 %v120
    %168 = vmatprep.subr.mxu0 0.0
    %169 = vmatpush1.msra.mxu0 %v119
    %170 = vmatprep.subr.mxu0 0.0
    %171 = vmatpush1.msra.mxu0 %v118
    %172 = vmatprep.subr.mxu0 0.0
    %173 = vmatpush2.msra.mxu0 0.0
    %174 = vmatprep.subr.mxu0 0.0
    %175 = vmatpush2.msra.mxu0 0.0
    %176 = vmatprep.subr.mxu0 0.0
    %177 = vmatpush2.msra.mxu0 0.0
    %178 = vmatprep.subr.mxu0 0.0
    %179 = vmatpush2.msra.mxu0 0.0
    %180 = vmatprep.subr.mxu0 0.0
    %181 = vmatpush2.msra.mxu0 0.0
    %182 = vmatprep.subr.mxu0 0.0
    %183 = vmatpush2.msra.mxu0 0.0
    %184 = vmatprep.subr.mxu0 0.0
    %185 = vmatpush2.msra.mxu0 0.0
    %186 = vmatprep.subr.mxu0 0.0
    %187 = vmatpush2.msra.mxu0 0.0
    %188 = vmatprep.subr.mxu0 0.0
    %189 = vmatpush2.msra.mxu0 0.0
    %190 = vmatprep.subr.mxu0 0.0
    %191 = vmatpush2.msra.mxu0 0.0
    %192 = vmatprep.subr.mxu0 0.0
    %193 = vmatpush2.msra.mxu0 0.0
    %194 = vmatprep.subr.mxu0 0.0
    %195 = vmatpush2.msra.mxu0 0.0
    %196 = vmatprep.subr.mxu0 0.0
    %197 = vmatpush2.msra.mxu0 0.0
    %198 = vmatprep.subr.mxu0 0.0
    %199 = vmatpush2.msra.mxu0 0.0
    %200 = vmatprep.subr.mxu0 0.0
    %201 = vmatpush2.msra.mxu0 0.0
    %202 = vmatprep.subr.mxu0 0.0
    %203 = vmatpush2.msra.mxu0 0.0
    %204 = vmatprep.mubr.f32.mxu0 0.0
    %205 = vmatmul.mubr.f32.gmra.mxu0 %v135
    %v206 = vpop.f32.mrf.mxu0
    %v207 = vadd.f32 %v131, %v206
    %v208 = vpop.f32.mrf.mxu0
    %209 = vmatprep.mubr.f32.mxu0 0.0
    %210 = vmatmul.mubr.f32.gmra.mxu0 %v138
    %v211 = vpop.f32.mrf.mxu0
    %v212 = vadd.f32 %v131, %v211
    %v213 = vpop.f32.mrf.mxu0
    %214 = vdwg.mxu0
    %215 = vst.msk [vmem:[#allocation2] sm:$0xff] %vm34, %v207
    %216 = vst.msk [vmem:[#allocation2 + $0x8] sm:$0xff] %vm34, %v212
    // Predicated region
    $region22: #{tpu_custom_call.1} parent=1 // pred_check
      _
    $region23: #{tpu_custom_call.1} parent=1 // pred_check_branch
      %218 = sbr.rel (0) target = $region25
    $region24: #{tpu_custom_call.1} parent=1 // pred_region
      %s220 = ssub.s32 256, 256
      %221 = vsyncadd [#allocation3], %s220
      %s222 = sshll.u32 [#allocation2], 4
      %s223 = int_to_ptr.vmem [resolvable:$true] %s222
      %228 = dma.vmem_to_hbm [thread:$0]  %s223, 256, %s5, [#allocation3], 128, 128, 8
    $region25: #{tpu_custom_call.1} parent=1 // pred_fallthru
      _
    // Predicated region
    $region26: #{tpu_custom_call.1} parent=1 // pred_check
      _
    $region27: #{tpu_custom_call.1} parent=1 // pred_check_branch
      %230 = sbr.rel (0) target = $region29
    $region28: #{tpu_custom_call.1} parent=1 // pred_region
      %231 = dma.done [#allocation3], 256
    $region29: #{tpu_custom_call.1} parent=1 // pred_fallthru
      _
    %232 = vsyncpa [#allocation3], 1

</llo_original>
